<compile_context>
chip_gen: v6e
topology: v6e:2x2x1
jax: 0.10.0
libtpu: 0.0.40
codegen_flags: <defaults>
</compile_context>

<pallas_src>
import jax
import jax.numpy as jnp
from jax import lax
from jax.experimental import pallas as pl
from jax.experimental.pallas import tpu as pltpu


def _temporal_attn_kernel(q_ref, k_ref, v_ref, x_ref, o_ref, attn_ref):
    # q/k/v: (C, N) for this f ; x/o: (block_b, C, N) ; attn_ref: (C, N) f32 scratch.

    @pl.when(pl.program_id(1) == 0)           # first batch tile of this f
    def _():
        q = q_ref[...]
        k = k_ref[...]
        # logits[c, d] = sum_n q[c, n] * k[d, n]  (contract N of both operands,
        # no explicit transpose).                                       (C, C)
        logits = lax.dot_general(
            q, k,
            dimension_numbers=(((1,), (1,)), ((), ())),
            preferred_element_type=jnp.float32)

        # Numerically-stable softmax over the last dim (matches F.softmax).
        m = jnp.max(logits, axis=-1, keepdims=True)
        e = jnp.exp(logits - m)
        w = e * pl.reciprocal(jnp.sum(e, axis=-1, keepdims=True), approx=True)

        # (C, C) @ (C, N) -> (C, N): batch-invariant attention output.   [MXU]
        attn_ref[...] = jnp.dot(w, v_ref[...], preferred_element_type=jnp.float32)

    # Elementwise gate, broadcast over the batch tile.  Cast the (C, N) gate to
    # the output dtype once so the multiply runs at the narrow dtype's width.
    gate = attn_ref[...].astype(o_ref.dtype)
    o_ref[...] = gate[None, :, :] * x_ref[...]


def temporal_attention(x, query, key, value, *, block_b=None,
                       vmem_budget_bytes=8 << 20):
    """x: (B, F, C, N); query/key/value: (F, C, N). Returns (B, F, C, N)."""
    B, F, C, N = x.shape
    assert query.shape == (F, C, N)
    assert key.shape == (F, C, N)
    assert value.shape == (F, C, N)

    # Pick a batch tile: largest divisor of B whose double-buffered x + out
    # working set fits the budget.  (Here the whole batch fits in one tile.)
    if block_b is None:
        itemsize = jnp.dtype(x.dtype).itemsize
        block_b = B
        while block_b > 1 and 4 * block_b * C * N * itemsize > vmem_budget_bytes:
            block_b //= 2
        while B % block_b:
            block_b -= 1
    nb = B // block_b

    # Params: one (C, N) tile per f.  Their index map ignores the batch-tile
    # axis, so for a fixed f they stay resident across batch tiles.
    param_spec = pl.BlockSpec((None, C, N), lambda f, b: (f, 0, 0))
    # x / out: (block_b, C, N) per step; last two dims are (C, N) -> lane-dense.
    x_spec = pl.BlockSpec((block_b, None, C, N), lambda f, b: (b, f, 0, 0))

    return pl.pallas_call(
        _temporal_attn_kernel,
        out_shape=jax.ShapeDtypeStruct((B, F, C, N), x.dtype),
        grid_spec=pltpu.PrefetchScalarGridSpec(
            num_scalar_prefetch=0,
            grid=(F, nb),
            in_specs=[param_spec, param_spec, param_spec, x_spec],
            out_specs=x_spec,
            scratch_shapes=[pltpu.VMEM((C, N), jnp.float32)],
        ),
        compiler_params=pltpu.CompilerParams(
            # F is independent (megacore-splittable); batch-tile axis carries
            # the cached attention in scratch, so keep it "arbitrary".
            dimension_semantics=("parallel", "arbitrary")),
    )(query, key, value, x)


def temporal_attention_ref(x, query, key, value):
    """Pure-JAX reference matching the PyTorch module."""
    logits = jnp.einsum("fcn,fdn->fcd", query, key)
    w = jax.nn.softmax(logits, axis=-1)
    attn = jnp.einsum("fcd,fdn->fcn", w, value)
    return attn[None] * x


if __name__ == "__main__":
    # Small, module-consistent shapes: batch=2, featuregra=4, channels=8, freqs=128
    B, F, C, N = 2, 4, 8, 128

    key0 = jax.random.PRNGKey(0)
    kx, kq, kk, kv = jax.random.split(key0, 4)

    x = jax.random.normal(kx, (B, F, C, N), dtype=jnp.float32)
    # Deterministic stand-ins for the module's nn.init.normal_ parameters.
    # TODO(synk): the PyTorch module re-draws fresh random Q/K/V inside every
    # forward; here they are deterministic explicit inputs instead.
    query = jax.random.normal(kq, (F, C, N), dtype=jnp.float32)
    keyp = jax.random.normal(kk, (F, C, N), dtype=jnp.float32)
    value = jax.random.normal(kv, (F, C, N), dtype=jnp.float32)

    out = temporal_attention(x, query, keyp, value)
    out = jax.block_until_ready(out)

    ref = temporal_attention_ref(x, query, keyp, value)
    assert out.shape == (B, F, C, N)
    # Tolerance loosened slightly for the EUP approximate reciprocal used in
    # the softmax denominator.
    assert jnp.allclose(out, ref, atol=1e-2, rtol=1e-2), "mismatch vs reference"

    print("KERNEL_OK")
</pallas_src>

<mosaic_0001>
module attributes {stable_mosaic.version = 11 : i64} {
  func.func @_temporal_attn_kernel(%arg0: i32, %arg1: i32, %arg2: memref<1x8x128xf32, #tpu.memory_space<vmem>>, %arg3: memref<1x8x128xf32, #tpu.memory_space<vmem>>, %arg4: memref<1x8x128xf32, #tpu.memory_space<vmem>>, %arg5: memref<2x1x8x128xf32, #tpu.memory_space<vmem>>, %arg6: memref<2x1x8x128xf32, #tpu.memory_space<vmem>>, %arg7: memref<8x128xf32, #tpu.memory_space<vmem>>) attributes {dimension_semantics = [#tpu.dimension_semantics<parallel>, #tpu.dimension_semantics<arbitrary>], iteration_bounds = array<i64: 4, 1>, scalar_prefetch = 0 : i64, scratch_operands = 1 : i64, tpu.core_type = #tpu.core_type<tc>, window_params = [{transform_indices = @transform_0, window_bounds = array<i64: 1, 8, 128>}, {transform_indices = @transform_1, window_bounds = array<i64: 1, 8, 128>}, {transform_indices = @transform_2, window_bounds = array<i64: 1, 8, 128>}, {transform_indices = @transform_3, window_bounds = array<i64: 2, 1, 8, 128>}, {transform_indices = @transform_4, window_bounds = array<i64: 2, 1, 8, 128>}]} {
    %c0_i32 = arith.constant 0 : i32
    %0 = arith.cmpi eq, %arg1, %c0_i32 : i32
    %1 = arith.extui %0 : i1 to i32
    %c0_i32_0 = arith.constant 0 : i32
    %2 = arith.cmpi ne, %1, %c0_i32_0 : i32
    scf.if %2 {
      %c0_10 = arith.constant 0 : index
      %c0_11 = arith.constant 0 : index
      %c0_12 = arith.constant 0 : index
      %12 = vector.load %arg2[%c0_10, %c0_11, %c0_12] : memref<1x8x128xf32, #tpu.memory_space<vmem>>, vector<1x8x128xf32>
      %13 = vector.shape_cast %12 : vector<1x8x128xf32> to vector<8x128xf32>
      %c0_13 = arith.constant 0 : index
      %c0_14 = arith.constant 0 : index
      %c0_15 = arith.constant 0 : index
      %14 = vector.load %arg3[%c0_13, %c0_14, %c0_15] : memref<1x8x128xf32, #tpu.memory_space<vmem>>, vector<1x8x128xf32>
      %15 = vector.shape_cast %14 : vector<1x8x128xf32> to vector<8x128xf32>
      %cst = arith.constant dense<0.000000e+00> : vector<8x8xf32>
      %16 = tpu.matmul %13, %15, %cst {dimension_numbers = #tpu.dot_dimension_numbers<[1], [1], [0], [0], [0, 0, 1, 0], [], []>} : vector<8x128xf32>, vector<8x128xf32>, vector<8x8xf32> -> vector<8x8xf32>
      %cst_16 = arith.constant dense<0xFF800000> : vector<8xf32>
      %17 = vector.multi_reduction <maximumf>, %16, %cst_16 [1] : vector<8x8xf32> to vector<8xf32>
      %18 = vector.shape_cast %17 : vector<8xf32> to vector<8x1xf32>
      %19 = vector.broadcast %18 : vector<8x1xf32> to vector<8x8xf32>
      %20 = arith.subf %16, %19 : vector<8x8xf32>
      %21 = math.exp %20 : vector<8x8xf32>
      %cst_17 = arith.constant dense<0.000000e+00> : vector<8xf32>
      %22 = vector.multi_reduction <add>, %21, %cst_17 [1] : vector<8x8xf32> to vector<8xf32>
      %23 = vector.shape_cast %22 : vector<8xf32> to vector<8x1xf32>
      %24 = tpu.reciprocal %23 {approx = true} : vector<8x1xf32> -> vector<8x1xf32>
      %25 = vector.broadcast %24 : vector<8x1xf32> to vector<8x8xf32>
      %26 = arith.mulf %21, %25 : vector<8x8xf32>
      %c0_18 = arith.constant 0 : index
      %c0_19 = arith.constant 0 : index
      %c0_20 = arith.constant 0 : index
      %27 = vector.load %arg4[%c0_18, %c0_19, %c0_20] : memref<1x8x128xf32, #tpu.memory_space<vmem>>, vector<1x8x128xf32>
      %28 = vector.shape_cast %27 : vector<1x8x128xf32> to vector<8x128xf32>
      %cst_21 = arith.constant dense<0.000000e+00> : vector<8x128xf32>
      %29 = tpu.matmul %26, %28, %cst_21 {dimension_numbers = #tpu.dot_dimension_numbers<[1], [0], [0], [1], [0, 0, 1, 1], [], []>} : vector<8x8xf32>, vector<8x128xf32>, vector<8x128xf32> -> vector<8x128xf32>
      %c0_22 = arith.constant 0 : index
      %c0_23 = arith.constant 0 : index
      %30 = vector.load %arg7[%c0_22, %c0_23] : memref<8x128xf32, #tpu.memory_space<vmem>>, vector<8x128xf32>
      tpu.vector_store %arg7[%c0_22, %c0_23], %29 {strides = array<i32>} : memref<8x128xf32, #tpu.memory_space<vmem>>, vector<8x128xf32>,
    } else {
    }
    %c0 = arith.constant 0 : index
    %c0_1 = arith.constant 0 : index
    %3 = vector.load %arg7[%c0, %c0_1] : memref<8x128xf32, #tpu.memory_space<vmem>>, vector<8x128xf32>
    %4 = vector.shape_cast %3 : vector<8x128xf32> to vector<1x8x128xf32>
    %c0_2 = arith.constant 0 : index
    %c0_3 = arith.constant 0 : index
    %c0_4 = arith.constant 0 : index
    %c0_5 = arith.constant 0 : index
    %5 = vector.load %arg5[%c0_2, %c0_3, %c0_4, %c0_5] : memref<2x1x8x128xf32, #tpu.memory_space<vmem>>, vector<2x1x8x128xf32>
    %6 = vector.shape_cast %5 : vector<2x1x8x128xf32> to vector<2x8x128xf32>
    %7 = vector.broadcast %4 : vector<1x8x128xf32> to vector<2x8x128xf32>
    %8 = arith.mulf %7, %6 : vector<2x8x128xf32>
    %c0_6 = arith.constant 0 : index
    %c0_7 = arith.constant 0 : index
    %c0_8 = arith.constant 0 : index
    %c0_9 = arith.constant 0 : index
    %9 = vector.load %arg6[%c0_6, %c0_7, %c0_8, %c0_9] : memref<2x1x8x128xf32, #tpu.memory_space<vmem>>, vector<2x1x8x128xf32>
    %10 = vector.shape_cast %9 : vector<2x1x8x128xf32> to vector<2x8x128xf32>
    %11 = vector.shape_cast %8 : vector<2x8x128xf32> to vector<2x1x8x128xf32>
    tpu.vector_store %arg6[%c0_6, %c0_7, %c0_8, %c0_9], %11 {strides = array<i32>} : memref<2x1x8x128xf32, #tpu.memory_space<vmem>>, vector<2x1x8x128xf32>,
    return
  }
  func.func @transform_0(%arg0: i32, %arg1: i32) -> (i32, i32, i32) {
    %c0_i32 = arith.constant 0 : i32
    %c0_i32_0 = arith.constant 0 : i32
    %c0_i32_1 = arith.constant 0 : i32
    return %arg0, %c0_i32, %c0_i32_0 : i32, i32, i32
  }
  func.func @transform_1(%arg0: i32, %arg1: i32) -> (i32, i32, i32) {
    %c0_i32 = arith.constant 0 : i32
    %c0_i32_0 = arith.constant 0 : i32
    %c0_i32_1 = arith.constant 0 : i32
    return %arg0, %c0_i32, %c0_i32_0 : i32, i32, i32
  }
  func.func @transform_2(%arg0: i32, %arg1: i32) -> (i32, i32, i32) {
    %c0_i32 = arith.constant 0 : i32
    %c0_i32_0 = arith.constant 0 : i32
    %c0_i32_1 = arith.constant 0 : i32
    return %arg0, %c0_i32, %c0_i32_0 : i32, i32, i32
  }
  func.func @transform_3(%arg0: i32, %arg1: i32) -> (i32, i32, i32, i32) {
    %c0_i32 = arith.constant 0 : i32
    %c0_i32_0 = arith.constant 0 : i32
    %c0_i32_1 = arith.constant 0 : i32
    return %arg1, %arg0, %c0_i32, %c0_i32_0 : i32, i32, i32, i32
  }
  func.func @transform_4(%arg0: i32, %arg1: i32) -> (i32, i32, i32, i32) {
    %c0_i32 = arith.constant 0 : i32
    %c0_i32_0 = arith.constant 0 : i32
    %c0_i32_1 = arith.constant 0 : i32
    return %arg1, %arg0, %c0_i32, %c0_i32_0 : i32, i32, i32, i32
  }
}

</mosaic_0001>

<llo_original>
// kernel: tpu_custom_call.1
$region0: #{tpu_custom_call.1}
  #allocation0 [shape = 'u32[]', space=smem, size = 0x4, offset = 0x4, fixed_abs, tag = 'smem constant byte address 0x4 - core index']
  #allocation1 [shape = 'u32[144,128]{1,0:T(1,128)}', space=vmem, size = 0x12000, scoped, tag = 'internal scratch']
  #allocation2 [shape = 'f32[8,128]{1,0:T(8,128)}', space=vmem, size = 0x1000, scoped, tag = 'scratch operand']
  %s0 = inlined_call_operand.hbm [shape: f32[4,8,128], index: 0, kind: input, shape index: {}]
  %s1 = inlined_call_operand.hbm [shape: f32[4,8,128], index: 1, kind: input, shape index: {}]
  %s2 = inlined_call_operand.hbm [shape: f32[4,8,128], index: 2, kind: input, shape index: {}]
  %s3 = inlined_call_operand.hbm [shape: f32[2,4,8,128], index: 3, kind: input, shape index: {}]
  %s4 = inlined_call_operand.hbm [shape: f32[2,4,8,128], index: 4, kind: output, shape index: {}]
  %s5 = sld [smem:[#allocation0]]
  $region69: #{tpu_custom_call.1} parent=0
    _
  %s7 = ssub.s32 1, %s5
  %s8 = scalar_select 0, %s7, %s5
  $region1: #{tpu_custom_call.1} parent=0
    #allocation3 [shape = 'u8[8192]{0}', space=vmem, size = 0x2000, scoped, tag = 'input window, operand 0']
    #allocation4 [shape = 's32[2]{0}', space=sflag, size = 0x8, scoped, tag = 'scoped memory for tpu_custom_call.1']
    #allocation5 [shape = 's32[2]{0}', space=sflag, size = 0x8, scoped, tag = 'scoped memory for tpu_custom_call.1']
    #allocation6 [shape = 'u8[8192]{0}', space=vmem, size = 0x2000, scoped, tag = 'input window, operand 1']
    #allocation7 [shape = 's32[2]{0}', space=sflag, size = 0x8, scoped, tag = 'scoped memory for tpu_custom_call.1']
    #allocation8 [shape = 'u8[8192]{0}', space=vmem, size = 0x2000, scoped, tag = 'input window, operand 2']
    #allocation9 [shape = 'u8[16384]{0}', space=vmem, size = 0x4000, scoped, tag = 'input window, operand 3']
    #allocation10 [shape = 's32[2]{0}', space=sflag, size = 0x8, scoped, tag = 'scoped memory for tpu_custom_call.1']
    #allocation11 [shape = 'u8[16384]{0}', space=vmem, size = 0x4000, scoped, tag = 'output window, operand 0']
    %9 = vsyncpa [#allocation4], 0
    %s10 = scalar_lea.sflag [#allocation4], 1
    %11 = vsyncpa %s10, 0
    %12 = vsyncpa [#allocation7], 0
    %s13 = scalar_lea.sflag [#allocation7], 1
    %14 = vsyncpa %s13, 0
    %15 = vsyncpa [#allocation10], 0
    %s16 = scalar_lea.sflag [#allocation10], 1
    %17 = vsyncpa %s16, 0
    %18 = vsyncpa [#allocation5], 0
    %s19 = scalar_lea.sflag [#allocation5], 1
    %20 = vsyncpa %s19, 0
    loop: start=0, step=1, limit=6
    $region2: #{tpu_custom_call.1} parent=1 // loop_pre_header
      _
    $region3: #{tpu_custom_call.1} parent=1 // loop_header
      %s22 = sphi 0, %s26
      %p23 = scmp.ge.s32.totalorder %s22, 6
      %s29 = sphi 0, %s41
      %s30 = sphi 0, %s37
      %s31 = sphi 0, %s29
      %s32 = sphi 0, %s30
      %s33 = sphi 0, %s31
      %s34 = sphi 0, %s32
      %s44 = sphi 0, %s46
      %s47 = sphi 0, %s44
      %s48 = sphi 0, %s47
      %s64 = sphi 0, %s48
      %s70 = sphi 0, %s72
      %s73 = sphi 0, %s70
      %s74 = sphi 0, %s73
      %s90 = sphi 0, %s74
      %s96 = sphi 0, %s98
      %s99 = sphi 0, %s96
      %s100 = sphi 0, %s99
      %s116 = sphi 0, %s100
      %s124 = sphi 0, %s126
      %s127 = sphi 0, %s124
      %s128 = sphi 0, %s127
      %s144 = sphi 0, %s128
      %s152 = sphi 0, %s154
      %s155 = sphi 0, %s152
      %s156 = sphi 0, %s155
      %s172 = sphi 0, %s156
    $region4: #{tpu_custom_call.1} parent=1 // loop_header_branch
      %25 = sbr.rel (%p23) target = $region8
    $region5: #{tpu_custom_call.1} parent=1 // loop_body
      %s27 = ssub.s32 %s22, 1
      %s28 = ssub.s32 %s22, 2
      %s35 = sadd.s32 1, %s30
      %p36 = scmp.ge.s32.totalorder %s35, 1
      %s37 = scalar_select %p36, 0, %s35
      %s38 = sadd.s32 1, %s29
      %s39 = scalar_select %p36, %s38, %s29
      %p40 = scmp.ge.s32.totalorder %s39, 4
      %s41 = scalar_select %p40, 0, %s39
      %s42 = ssub.s32 %s29, %s41
      %p43 = scmp.eq.s32.totalorder %s42, 0
      %s45 = sadd.s32 %s44, 1
      %s46 = scalar_select %p43, %s44, %s45
      %p49 = pneg %p43
      %p50 = scmp.eq.s32.totalorder %s22, 3
      %p51 = por %p49, %p50
      %p52 = scmp.ne.s32.totalorder %s44, %s47
      %p53 = scmp.eq.s32.totalorder %s22, 0
      %p54 = por %p52, %p53
      %p55 = scmp.ne.s32.totalorder %s44, %s47
      %p56 = scmp.eq.s32.totalorder %s27, 3
      %p57 = por %p55, %p56
      %p58 = scmp.ne.s32.totalorder %s47, %s48
      %p59 = scmp.eq.s32.totalorder %s27, 0
      %p60 = por %p58, %p59
      %p61 = scmp.ne.s32.totalorder %s47, %s48
      %p62 = scmp.eq.s32.totalorder %s28, 3
      %p63 = por %p61, %p62
      %p65 = scmp.ne.s32.totalorder %s48, %s64
      %p66 = scmp.eq.s32.totalorder %s28, 0
      %p67 = por %p65, %p66
      %s68 = ssub.s32 %s29, %s41
      %p69 = scmp.eq.s32.totalorder %s68, 0
      %s71 = sadd.s32 %s70, 1
      %s72 = scalar_select %p69, %s70, %s71
      %p75 = pneg %p69
      %p76 = scmp.eq.s32.totalorder %s22, 3
      %p77 = por %p75, %p76
      %p78 = scmp.ne.s32.totalorder %s70, %s73
      %p79 = scmp.eq.s32.totalorder %s22, 0
      %p80 = por %p78, %p79
      %p81 = scmp.ne.s32.totalorder %s70, %s73
      %p82 = scmp.eq.s32.totalorder %s27, 3
      %p83 = por %p81, %p82
      %p84 = scmp.ne.s32.totalorder %s73, %s74
      %p85 = scmp.eq.s32.totalorder %s27, 0
      %p86 = por %p84, %p85
      %p87 = scmp.ne.s32.totalorder %s73, %s74
      %p88 = scmp.eq.s32.totalorder %s28, 3
      %p89 = por %p87, %p88
      %p91 = scmp.ne.s32.totalorder %s74, %s90
      %p92 = scmp.eq.s32.totalorder %s28, 0
      %p93 = por %p91, %p92
      %s94 = ssub.s32 %s29, %s41
      %p95 = scmp.eq.s32.totalorder %s94, 0
      %s97 = sadd.s32 %s96, 1
      %s98 = scalar_select %p95, %s96, %s97
      %p101 = pneg %p95
      %p102 = scmp.eq.s32.totalorder %s22, 3
      %p103 = por %p101, %p102
      %p104 = scmp.ne.s32.totalorder %s96, %s99
      %p105 = scmp.eq.s32.totalorder %s22, 0
      %p106 = por %p104, %p105
      %p107 = scmp.ne.s32.totalorder %s96, %s99
      %p108 = scmp.eq.s32.totalorder %s27, 3
      %p109 = por %p107, %p108
      %p110 = scmp.ne.s32.totalorder %s99, %s100
      %p111 = scmp.eq.s32.totalorder %s27, 0
      %p112 = por %p110, %p111
      %p113 = scmp.ne.s32.totalorder %s99, %s100
      %p114 = scmp.eq.s32.totalorder %s28, 3
      %p115 = por %p113, %p114
      %p117 = scmp.ne.s32.totalorder %s100, %s116
      %p118 = scmp.eq.s32.totalorder %s28, 0
      %p119 = por %p117, %p118
      %s120 = ssub.s32 %s30, %s37
      %s121 = ssub.s32 %s29, %s41
      %s122 = sor.u32 %s120, %s121
      %p123 = scmp.eq.s32.totalorder %s122, 0
      %s125 = sadd.s32 %s124, 1
      %s126 = scalar_select %p123, %s124, %s125
      %p129 = pneg %p123
      %p130 = scmp.eq.s32.totalorder %s22, 3
      %p131 = por %p129, %p130
      %p132 = scmp.ne.s32.totalorder %s124, %s127
      %p133 = scmp.eq.s32.totalorder %s22, 0
      %p134 = por %p132, %p133
      %p135 = scmp.ne.s32.totalorder %s124, %s127
      %p136 = scmp.eq.s32.totalorder %s27, 3
      %p137 = por %p135, %p136
      %p138 = scmp.ne.s32.totalorder %s127, %s128
      %p139 = scmp.eq.s32.totalorder %s27, 0
      %p140 = por %p138, %p139
      %p141 = scmp.ne.s32.totalorder %s127, %s128
      %p142 = scmp.eq.s32.totalorder %s28, 3
      %p143 = por %p141, %p142
      %p145 = scmp.ne.s32.totalorder %s128, %s144
      %p146 = scmp.eq.s32.totalorder %s28, 0
      %p147 = por %p145, %p146
      %s148 = ssub.s32 %s30, %s37
      %s149 = ssub.s32 %s29, %s41
      %s150 = sor.u32 %s148, %s149
      %p151 = scmp.eq.s32.totalorder %s150, 0
      %s153 = sadd.s32 %s152, 1
      %s154 = scalar_select %p151, %s152, %s153
      %p157 = pneg %p151
      %p158 = scmp.eq.s32.totalorder %s22, 3
      %p159 = por %p157, %p158
      %p160 = scmp.ne.s32.totalorder %s152, %s155
      %p161 = scmp.eq.s32.totalorder %s22, 0
      %p162 = por %p160, %p161
      %p163 = scmp.ne.s32.totalorder %s152, %s155
      %p164 = scmp.eq.s32.totalorder %s27, 3
      %p165 = por %p163, %p164
      %p166 = scmp.ne.s32.totalorder %s155, %s156
      %p167 = scmp.eq.s32.totalorder %s27, 0
      %p168 = por %p166, %p167
      %p169 = scmp.ne.s32.totalorder %s155, %s156
      %p170 = scmp.eq.s32.totalorder %s28, 3
      %p171 = por %p169, %p170
      %p173 = scmp.ne.s32.totalorder %s156, %s172
      %p174 = scmp.eq.s32.totalorder %s28, 0
      %p175 = por %p173, %p174
      %p176 = scmp.le.s32.totalorder 1, %s22
      %p177 = scmp.lt.s32.totalorder %s22, 5
      %p178 = pnand %p176, %p177
      %p179 = pneg %p178
      // Predicated region
      $region9: #{tpu_custom_call.1} parent=5 // pred_check
        _
      $region10: #{tpu_custom_call.1} parent=5 // pred_check_branch
        %181 = sbr.rel (%p178) target = $region12
      $region11: #{tpu_custom_call.1} parent=5 // pred_region
        %s182 = ssub.s32 %s22, 1
      $region12: #{tpu_custom_call.1} parent=5 // pred_fallthru
        _
      %p183 = scmp.lt.s32.totalorder %s22, 4
      // Predicated region
      $region13: #{tpu_custom_call.1} parent=5 // pred_check
        %p184 = pneg %p183
      $region14: #{tpu_custom_call.1} parent=5 // pred_check_branch
        %186 = sbr.rel (%p184) target = $region16
      $region15: #{tpu_custom_call.1} parent=5 // pred_region
        // Predicated region
        $region17: #{tpu_custom_call.1} parent=15 // pred_check
          %p187 = pneg %p54
        $region18: #{tpu_custom_call.1} parent=15 // pred_check_branch
          %189 = sbr.rel (%p187) target = $region20
        $region19: #{tpu_custom_call.1} parent=15 // pred_region
          %s190 = sand.u32 %s44, 1
          %s191 = scalar_lea.sflag [#allocation4], %s190
          %s192 = sand.u32 %s44, 1
          %s193 = smul.addr %s192, 8
          %s194 = scalar_lea.vmem [#allocation3], %s193
          %s196 = ssub.s32 128, 128
          %197 = vsyncadd %s191, %s196
          %s198 = smul.addr %s29, 128
          %s199 = scalar_lea.hbm %s0, %s198
          %s201 = sshll.u32 %s194, 4
          %s202 = int_to_ptr.vmem [resolvable:$true] %s201
          %204 = dma.hbm_to_vmem [thread:$0]  %s199, 128, %s202, %s191
        $region20: #{tpu_custom_call.1} parent=15 // pred_fallthru
          _
        // Predicated region
        $region21: #{tpu_custom_call.1} parent=15 // pred_check
          %p205 = pneg %p80
        $region22: #{tpu_custom_call.1} parent=15 // pred_check_branch
          %207 = sbr.rel (%p205) target = $region24
        $region23: #{tpu_custom_call.1} parent=15 // pred_region
          %s208 = sand.u32 %s22, 1
          %s209 = scalar_lea.sflag [#allocation7], %s208
          %s210 = sand.u32 %s70, 1
          %s211 = smul.addr %s210, 8
          %s212 = scalar_lea.vmem [#allocation6], %s211
          %s214 = ssub.s32 128, 128
          %215 = vsyncadd %s209, %s214
          %s216 = smul.addr %s29, 128
          %s217 = scalar_lea.hbm %s1, %s216
          %s219 = sshll.u32 %s212, 4
          %s220 = int_to_ptr.vmem [resolvable:$true] %s219
          %222 = dma.hbm_to_vmem [thread:$0]  %s217, 128, %s220, %s209
        $region24: #{tpu_custom_call.1} parent=15 // pred_fallthru
          _
        // Predicated region
        $region25: #{tpu_custom_call.1} parent=15 // pred_check
          %p223 = pneg %p106
        $region26: #{tpu_custom_call.1} parent=15 // pred_check_branch
          %225 = sbr.rel (%p223) target = $region28
        $region27: #{tpu_custom_call.1} parent=15 // pred_region
          %s226 = sand.u32 %s22, 1
          %s227 = scalar_lea.sflag [#allocation7], %s226
          %s228 = sand.u32 %s96, 1
          %s229 = smul.addr %s228, 8
          %s230 = scalar_lea.vmem [#allocation8], %s229
          %s232 = ssub.s32 128, 128
          %233 = vsyncadd %s227, %s232
          %s234 = smul.addr %s29, 128
          %s235 = scalar_lea.hbm %s2, %s234
          %s237 = sshll.u32 %s230, 4
          %s238 = int_to_ptr.vmem [resolvable:$true] %s237
          %240 = dma.hbm_to_vmem [thread:$0]  %s235, 128, %s238, %s227
        $region28: #{tpu_custom_call.1} parent=15 // pred_fallthru
          _
        // Predicated region
        $region29: #{tpu_custom_call.1} parent=15 // pred_check
          %p241 = pneg %p134
        $region30: #{tpu_custom_call.1} parent=15 // pred_check_branch
          %243 = sbr.rel (%p241) target = $region32
        $region31: #{tpu_custom_call.1} parent=15 // pred_region
          %s244 = sand.u32 %s124, 1
          %s245 = scalar_lea.sflag [#allocation10], %s244
          %s246 = sand.u32 %s124, 1
          %s247 = smul.addr %s246, 16
          %s248 = scalar_lea.vmem [#allocation9], %s247
          %s249 = smul.u32 2, %s30
          %s251 = ssub.s32 256, 256
          %252 = vsyncadd %s245, %s251
          %s253 = smul.addr %s249, 4
          %s254 = sadd.s32 %s29, %s253
          %s255 = smul.addr %s254, 128
          %s256 = scalar_lea.hbm %s3, %s255
          %s257 = sshll.u32 %s248, 4
          %s258 = int_to_ptr.vmem [resolvable:$true] %s257
          %263 = dma.hbm_to_vmem [thread:$0]  %s256, 256, %s258, %s245, 512, 128, 8
        $region32: #{tpu_custom_call.1} parent=15 // pred_fallthru
          _
      $region16: #{tpu_custom_call.1} parent=5 // pred_fallthru
        _
      %p264 = scmp.le.s32.totalorder 1, %s22
      %p265 = scmp.lt.s32.totalorder %s22, 5
      %p266 = pnand %p264, %p265
      %p267 = pneg %p266
      // Predicated region
      $region33: #{tpu_custom_call.1} parent=5 // pred_check
        _
      $region34: #{tpu_custom_call.1} parent=5 // pred_check_branch
        %269 = sbr.rel (%p266) target = $region36
      $region35: #{tpu_custom_call.1} parent=5 // pred_region
        %s270 = ssub.s32 %s22, 1
        %s271 = sand.u32 %s47, 1
        %s272 = scalar_lea.sflag [#allocation4], %s271
        %s273 = sand.u32 %s47, 1
        %s274 = smul.addr %s273, 8
        %s275 = scalar_lea.vmem [#allocation3], %s274
        // Predicated region
        $region37: #{tpu_custom_call.1} parent=35 // pred_check
          %p276 = pneg %p60
        $region38: #{tpu_custom_call.1} parent=35 // pred_check_branch
          %278 = sbr.rel (%p276) target = $region40
        $region39: #{tpu_custom_call.1} parent=35 // pred_region
          %279 = dma.done %s272, 128
        $region40: #{tpu_custom_call.1} parent=35 // pred_fallthru
          _
        %s280 = sand.u32 %s27, 1
        %s281 = scalar_lea.sflag [#allocation7], %s280
        %s282 = sand.u32 %s73, 1
        %s283 = smul.addr %s282, 8
        %s284 = scalar_lea.vmem [#allocation6], %s283
        // Predicated region
        $region41: #{tpu_custom_call.1} parent=35 // pred_check
          %p285 = pneg %p86
        $region42: #{tpu_custom_call.1} parent=35 // pred_check_branch
          %287 = sbr.rel (%p285) target = $region44
        $region43: #{tpu_custom_call.1} parent=35 // pred_region
          %288 = dma.done %s281, 128
        $region44: #{tpu_custom_call.1} parent=35 // pred_fallthru
          _
        %s289 = sand.u32 %s27, 1
        %s290 = scalar_lea.sflag [#allocation7], %s289
        %s291 = sand.u32 %s99, 1
        %s292 = smul.addr %s291, 8
        %s293 = scalar_lea.vmem [#allocation8], %s292
        // Predicated region
        $region45: #{tpu_custom_call.1} parent=35 // pred_check
          %p294 = pneg %p112
        $region46: #{tpu_custom_call.1} parent=35 // pred_check_branch
          %296 = sbr.rel (%p294) target = $region48
        $region47: #{tpu_custom_call.1} parent=35 // pred_region
          %297 = dma.done %s290, 128
        $region48: #{tpu_custom_call.1} parent=35 // pred_fallthru
          _
        %s298 = sand.u32 %s127, 1
        %s299 = scalar_lea.sflag [#allocation10], %s298
        %s300 = sand.u32 %s127, 1
        %s301 = smul.addr %s300, 16
        %s302 = scalar_lea.vmem [#allocation9], %s301
        // Predicated region
        $region49: #{tpu_custom_call.1} parent=35 // pred_check
          %p303 = pneg %p140
        $region50: #{tpu_custom_call.1} parent=35 // pred_check_branch
          %305 = sbr.rel (%p303) target = $region52
        $region51: #{tpu_custom_call.1} parent=35 // pred_region
          %306 = dma.done %s299, 256
        $region52: #{tpu_custom_call.1} parent=35 // pred_fallthru
          _
        %s307 = sand.u32 %s47, 1
        %s308 = scalar_lea.sflag [#allocation4], %s307
        %s309 = sand.u32 %s47, 1
        %s310 = smul.addr %s309, 8
        %s311 = scalar_lea.vmem [#allocation3], %s310
        %p312 = pneg %p60
        %p313 = pneg %p57
        %s314 = sand.u32 %s27, 1
        %s315 = scalar_lea.sflag [#allocation7], %s314
        %s316 = sand.u32 %s73, 1
        %s317 = smul.addr %s316, 8
        %s318 = scalar_lea.vmem [#allocation6], %s317
        %p319 = pneg %p86
        %p320 = pneg %p83
        %s321 = sand.u32 %s27, 1
        %s322 = scalar_lea.sflag [#allocation7], %s321
        %s323 = sand.u32 %s99, 1
        %s324 = smul.addr %s323, 8
        %s325 = scalar_lea.vmem [#allocation8], %s324
        %p326 = pneg %p112
        %p327 = pneg %p109
        %s328 = sand.u32 %s127, 1
        %s329 = scalar_lea.sflag [#allocation10], %s328
        %s330 = sand.u32 %s127, 1
        %s331 = smul.addr %s330, 16
        %s332 = scalar_lea.vmem [#allocation9], %s331
        %p333 = pneg %p140
        %p334 = pneg %p137
        %p335 = pneg %p168
        %p336 = pneg %p165
        %s337 = sand.u32 %s155, 1
        %s338 = scalar_lea.sflag [#allocation5], %s337
        %s339 = sand.u32 %s155, 1
        %s340 = smul.addr %s339, 16
        %s341 = scalar_lea.vmem [#allocation11], %s340
        %s342 = smul.u32 2, %s32
        %s343 = smul.u32 2, %s32
        %p344 = scmp.eq.s32.totalorder %s32, 0
        // Predicated region
        $region53: #{tpu_custom_call.1} parent=35 // pred_check
          %p345 = pneg %p344
        $region54: #{tpu_custom_call.1} parent=35 // pred_check_branch
          %347 = sbr.rel (%p345) target = $region56
        $region55: #{tpu_custom_call.1} parent=35 // pred_region
          %v348 = vld [vmem:[%s275] sm:$0xff]
          %v349 = vld [vmem:[%s284] sm:$0xff]
          %350 = vmatprep.subr.mxu0 0.0
          %351 = vmatpush1.xpose.msra.mxu0 0.0
          %352 = vmatprep.subr.mxu0 0.0
          %353 = vmatpush1.xpose.msra.mxu0 0.0
          %354 = vmatprep.subr.mxu0 0.0
          %355 = vmatpush1.xpose.msra.mxu0 0.0
          %356 = vmatprep.subr.mxu0 0.0
          %357 = vmatpush1.xpose.msra.mxu0 0.0
          %358 = vmatprep.subr.mxu0 0.0
          %359 = vmatpush1.xpose.msra.mxu0 0.0
          %360 = vmatprep.subr.mxu0 0.0
          %361 = vmatpush1.xpose.msra.mxu0 0.0
          %362 = vmatprep.subr.mxu0 0.0
          %363 = vmatpush1.xpose.msra.mxu0 0.0
          %364 = vmatprep.subr.mxu0 0.0
          %365 = vmatpush1.xpose.msra.mxu0 0.0
          %366 = vmatprep.subr.mxu0 0.0
          %367 = vmatpush1.xpose.msra.mxu0 0.0
          %368 = vmatprep.subr.mxu0 0.0
          %369 = vmatpush1.xpose.msra.mxu0 0.0
          %370 = vmatprep.subr.mxu0 0.0
          %371 = vmatpush1.xpose.msra.mxu0 0.0
          %372 = vmatprep.subr.mxu0 0.0
          %373 = vmatpush1.xpose.msra.mxu0 0.0
          %374 = vmatprep.subr.mxu0 0.0
          %375 = vmatpush1.xpose.msra.mxu0 0.0
          %376 = vmatprep.subr.mxu0 0.0
          %377 = vmatpush1.xpose.msra.mxu0 0.0
          %378 = vmatprep.subr.mxu0 0.0
          %379 = vmatpush1.xpose.msra.mxu0 0.0
          %380 = vmatprep.subr.mxu0 0.0
          %381 = vmatpush1.xpose.msra.mxu0 %v349
          %382 = vmatprep.subr.mxu0 0.0
          %383 = vmatpush2.xpose.msra.mxu0 0.0
          %384 = vmatprep.subr.mxu0 0.0
          %385 = vmatpush2.xpose.msra.mxu0 0.0
          %386 = vmatprep.subr.mxu0 0.0
          %387 = vmatpush2.xpose.msra.mxu0 0.0
          %388 = vmatprep.subr.mxu0 0.0
          %389 = vmatpush2.xpose.msra.mxu0 0.0
          %390 = vmatprep.subr.mxu0 0.0
          %391 = vmatpush2.xpose.msra.mxu0 0.0
          %392 = vmatprep.subr.mxu0 0.0
          %393 = vmatpush2.xpose.msra.mxu0 0.0
          %394 = vmatprep.subr.mxu0 0.0
          %395 = vmatpush2.xpose.msra.mxu0 0.0
          %396 = vmatprep.subr.mxu0 0.0
          %397 = vmatpush2.xpose.msra.mxu0 0.0
          %398 = vmatprep.subr.mxu0 0.0
          %399 = vmatpush2.xpose.msra.mxu0 0.0
          %400 = vmatprep.subr.mxu0 0.0
          %401 = vmatpush2.xpose.msra.mxu0 0.0
          %402 = vmatprep.subr.mxu0 0.0
          %403 = vmatpush2.xpose.msra.mxu0 0.0
          %404 = vmatprep.subr.mxu0 0.0
          %405 = vmatpush2.xpose.msra.mxu0 0.0
          %406 = vmatprep.subr.mxu0 0.0
          %407 = vmatpush2.xpose.msra.mxu0 0.0
          %408 = vmatprep.subr.mxu0 0.0
          %409 = vmatpush2.xpose.msra.mxu0 0.0
          %410 = vmatprep.subr.mxu0 0.0
          %411 = vmatpush2.xpose.msra.mxu0 0.0
          %412 = vmatprep.subr.mxu0 0.0
          %413 = vmatpush2.xpose.msra.mxu0 0.0
          %414 = vmatprep.mubr.f32.mxu0 0.0
          %415 = vmatmul.mubr.f32.gmra.mxu0 %v348
          %v416 = vpop.f32.mrf.mxu0
          %v417 = vadd.f32 0.0, %v416
          %v418 = vpop.f32.mrf.mxu0
          %419 = vdwg.mxu0
          %vm420 = vcmask 64512
          %v421 = vsel %vm420, %v417, -inf
          %422 = vmax.xlane.f32.xlu0 %v421
          %v423 = vpop.xlane.xlu0 %422
          %v424 = vsub.f32 %v417, %v423
          %v425 = vmul.f32 %v424, 1.442695
          %v426 = vpow.pop %v425
          %v427 = vsel %vm420, %v426, 0.0
          %428 = vadd.xlane.f32.xlu0 %v427
          %v429 = vpop.xlane.xlu0 %428
          %v430 = vrcp.pop %v429
          %v431 = vmul.f32 %v426, %v430
          %v432 = vld [vmem:[%s293] sm:$0xff]
          %v434 = vsel %vm420, %v431, 0
          %436 = vmatprep.subr.mxu0 0.0
          %437 = vmatpush1.msra.mxu0 0.0
          %438 = vmatprep.subr.mxu0 0.0
          %439 = vmatpush1.msra.mxu0 0.0
          %440 = vmatprep.subr.mxu0 0.0
          %441 = vmatpush1.msra.mxu0 0.0
          %442 = vmatprep.subr.mxu0 0.0
          %443 = vmatpush1.msra.mxu0 0.0
          %444 = vmatprep.subr.mxu0 0.0
          %445 = vmatpush1.msra.mxu0 0.0
          %446 = vmatprep.subr.mxu0 0.0
          %447 = vmatpush1.msra.mxu0 0.0
          %448 = vmatprep.subr.mxu0 0.0
          %449 = vmatpush1.msra.mxu0 0.0
          %450 = vmatprep.subr.mxu0 0.0
          %451 = vmatpush1.msra.mxu0 0.0
          %452 = vmatprep.subr.mxu0 0.0
          %453 = vmatpush1.msra.mxu0 0.0
          %454 = vmatprep.subr.mxu0 0.0
          %455 = vmatpush1.msra.mxu0 0.0
          %456 = vmatprep.subr.mxu0 0.0
          %457 = vmatpush1.msra.mxu0 0.0
          %458 = vmatprep.subr.mxu0 0.0
          %459 = vmatpush1.msra.mxu0 0.0
          %460 = vmatprep.subr.mxu0 0.0
          %461 = vmatpush1.msra.mxu0 0.0
          %462 = vmatprep.subr.mxu0 0.0
          %463 = vmatpush1.msra.mxu0 0.0
          %464 = vmatprep.subr.mxu0 0.0
          %465 = vmatpush1.msra.mxu0 0.0
          %466 = vmatprep.subr.mxu0 0.0
          %467 = vmatpush1.msra.mxu0 %v432
          %468 = vmatprep.subr.mxu0 0.0
          %469 = vmatpush2.msra.mxu0 0.0
          %470 = vmatprep.subr.mxu0 0.0
          %471 = vmatpush2.msra.mxu0 0.0
          %472 = vmatprep.subr.mxu0 0.0
          %473 = vmatpush2.msra.mxu0 0.0
          %474 = vmatprep.subr.mxu0 0.0
          %475 = vmatpush2.msra.mxu0 0.0
          %476 = vmatprep.subr.mxu0 0.0
          %477 = vmatpush2.msra.mxu0 0.0
          %478 = vmatprep.subr.mxu0 0.0
          %479 = vmatpush2.msra.mxu0 0.0
          %480 = vmatprep.subr.mxu0 0.0
          %481 = vmatpush2.msra.mxu0 0.0
          %482 = vmatprep.subr.mxu0 0.0
          %483 = vmatpush2.msra.mxu0 0.0
          %484 = vmatprep.subr.mxu0 0.0
          %485 = vmatpush2.msra.mxu0 0.0
          %486 = vmatprep.subr.mxu0 0.0
          %487 = vmatpush2.msra.mxu0 0.0
          %488 = vmatprep.subr.mxu0 0.0
          %489 = vmatpush2.msra.mxu0 0.0
          %490 = vmatprep.subr.mxu0 0.0
          %491 = vmatpush2.msra.mxu0 0.0
          %492 = vmatprep.subr.mxu0 0.0
          %493 = vmatpush2.msra.mxu0 0.0
          %494 = vmatprep.subr.mxu0 0.0
          %495 = vmatpush2.msra.mxu0 0.0
          %496 = vmatprep.subr.mxu0 0.0
          %497 = vmatpush2.msra.mxu0 0.0
          %498 = vmatprep.subr.mxu0 0.0
          %499 = vmatpush2.msra.mxu0 0.0
          %500 = vmatprep.mubr.f32.mxu0 0.0
          %501 = vmatmul.mubr.f32.gmra.mxu0 %v434
          %v502 = vpop.f32.mrf.mxu0
          %v503 = vadd.f32 0.0, %v502
          %v504 = vpop.f32.mrf.mxu0
          %505 = vdwg.mxu0
          %506 = vst [vmem:[#allocation2] sm:$0xff] %v503
        $region56: #{tpu_custom_call.1} parent=35 // pred_fallthru
          _
        %v507 = vld [vmem:[#allocation2] sm:$0xff]
        %v508 = vld [vmem:[%s302] sm:$0xff]
        %v509 = vld [vmem:[%s302 + $0x8] sm:$0xff]
        %v510 = vmul.f32 %v507, %v508
        %v511 = vmul.f32 %v507, %v509
        %512 = vst [vmem:[%s341] sm:$0xff] %v510
        %513 = vst [vmem:[%s341 + $0x8] sm:$0xff] %v511
        %s514 = sand.u32 %s155, 1
        %s515 = scalar_lea.sflag [#allocation5], %s514
        %s516 = sand.u32 %s155, 1
        %s517 = smul.addr %s516, 16
        %s518 = scalar_lea.vmem [#allocation11], %s517
        // Predicated region
        $region57: #{tpu_custom_call.1} parent=35 // pred_check
          %p519 = pneg %p165
        $region58: #{tpu_custom_call.1} parent=35 // pred_check_branch
          %521 = sbr.rel (%p519) target = $region60
        $region59: #{tpu_custom_call.1} parent=35 // pred_region
          %s522 = smul.u32 2, %s32
          %s524 = ssub.s32 256, 256
          %525 = vsyncadd %s515, %s524
          %s526 = smul.addr %s522, 4
          %s527 = sadd.s32 %s31, %s526
          %s528 = smul.addr %s527, 128
          %s529 = scalar_lea.hbm %s4, %s528
          %s530 = sshll.u32 %s518, 4
          %s531 = int_to_ptr.vmem [resolvable:$true] %s530
          %536 = dma.vmem_to_hbm [thread:$0]  %s531, 256, %s529, %s515, 128, 512, 8
        $region60: #{tpu_custom_call.1} parent=35 // pred_fallthru
          _
      $region36: #{tpu_custom_call.1} parent=5 // pred_fallthru
        _
      %p537 = scmp.le.s32.totalorder 2, %s22
      // Predicated region
      $region61: #{tpu_custom_call.1} parent=5 // pred_check
        %p538 = pneg %p537
      $region62: #{tpu_custom_call.1} parent=5 // pred_check_branch
        %540 = sbr.rel (%p538) target = $region64
      $region63: #{tpu_custom_call.1} parent=5 // pred_region
        %s541 = ssub.s32 %s22, 2
        // Predicated region
        $region65: #{tpu_custom_call.1} parent=63 // pred_check
          %p542 = pneg %p171
        $region66: #{tpu_custom_call.1} parent=63 // pred_check_branch
          %544 = sbr.rel (%p542) target = $region68
        $region67: #{tpu_custom_call.1} parent=63 // pred_region
          %s545 = sand.u32 %s156, 1
          %s546 = scalar_lea.sflag [#allocation5], %s545
          %s547 = sand.u32 %s156, 1
          %s548 = smul.addr %s547, 16
          %s549 = scalar_lea.vmem [#allocation11], %s548
          %550 = dma.done %s546, 256
        $region68: #{tpu_custom_call.1} parent=63 // pred_fallthru
          _
      $region64: #{tpu_custom_call.1} parent=5 // pred_fallthru
        _
    $region6: #{tpu_custom_call.1} parent=1 // loop_footer
      %s26 = sadd.s32 1, %s22
    $region7: #{tpu_custom_call.1} parent=1 // loop_footer_branch
      %21 = sbr.rel target = $region3
    $region8: #{tpu_custom_call.1} parent=1 // loop_exit
      _
    %551 = vsyncpa [#allocation4], 1
    %s552 = scalar_lea.sflag [#allocation4], 1
    %553 = vsyncpa %s552, 1
    %554 = vsyncpa [#allocation7], 1
    %s555 = scalar_lea.sflag [#allocation7], 1
    %556 = vsyncpa %s555, 1
    %557 = vsyncpa [#allocation10], 1
    %s558 = scalar_lea.sflag [#allocation10], 1
    %559 = vsyncpa %s558, 1
    %560 = vsyncpa [#allocation5], 1
    %s561 = scalar_lea.sflag [#allocation5], 1
    %562 = vsyncpa %s561, 1

</llo_original>
